<compile_context>
chip_gen: v7x
topology: tpu7x:2x2x1
jax: 0.10.0
libtpu: 0.0.40
codegen_flags: <defaults>
</compile_context>

<pallas_src>
import functools
import math

import jax
import jax.numpy as jnp
import numpy as np
from jax.experimental import pallas as pl
from jax.experimental.pallas import tpu as pltpu

BATCHNORM_EPSILON = 1e-4  # YAMNetParams.BATCHNORM_EPSILON


# ---------------------------------------------------------------------------
# TF-SAME padding (identical arithmetic to Conv2d_tf.tf_SAME_padding + its
# odd-padding trick => pad_before = total//2, pad_after = total - total//2).
# ---------------------------------------------------------------------------
def _tf_same_pad(in_size, k, stride):
    out_size = (in_size + stride - 1) // stride
    total = max(0, (out_size - 1) * stride + k - in_size)
    lo = total // 2
    hi = total - lo
    return lo, hi, out_size


# ---------------------------------------------------------------------------
# Pallas kernel: single matmul over the im2col slab + fused BN affine + ReLU.
# ---------------------------------------------------------------------------
def _matmul_bn_relu_kernel(x_ref, w_ref, scale_ref, bias_ref, o_ref):
    # x_ref:     (1, TM, K)     bf16 im2col rows for this (batch, row-tile)
    # w_ref:     (K, Cout)      bf16 flattened HWIO filter
    # scale_ref: (1, Cout)      f32 folded BN scale  gamma / sqrt(var + eps)
    # bias_ref:  (1, Cout)      f32 folded BN bias   beta - mean * scale
    # o_ref:     (1, TM, Cout)  f32
    acc = jnp.dot(x_ref[0], w_ref[...], preferred_element_type=jnp.float32)
    y = acc * scale_ref[...] + bias_ref[...]   # fused BatchNorm (inference)
    o_ref[0] = jnp.maximum(y, 0.0).astype(o_ref.dtype)   # ReLU


# ---------------------------------------------------------------------------
# Wrapper: NCHW in/out, TF-SAME padding, im2col, BN folding, pallas_call.
# ---------------------------------------------------------------------------
def conv_bn_relu(x_nchw, weight_oihw, gamma, beta, running_mean, running_var,
                 *, stride, eps=BATCHNORM_EPSILON, row_tile=512):
    assert row_tile % 8 == 0
    n, cin, h, w = x_nchw.shape
    cout, cin_w, kh, kw = weight_oihw.shape
    assert cin == cin_w
    sh = sw = int(stride)

    ph_lo, ph_hi, ho = _tf_same_pad(h, kh, sh)
    pw_lo, pw_hi, wo = _tf_same_pad(w, kw, sw)

    # NCHW -> NHWC (channels minor) so the im2col slab ends up lane-dense.
    x = jnp.transpose(x_nchw, (0, 2, 3, 1))
    x_pad = jnp.pad(x, ((0, 0), (ph_lo, ph_hi), (pw_lo, pw_hi), (0, 0)))

    # Wrapper-side im2col: (N, Ho*Wo, KH*KW*Cin).  Contracted-axis order is
    # (kh, kw, cin), matching the flattened HWIO weight below.
    taps = []
    for ikh in range(kh):
        for ikw in range(kw):
            taps.append(jax.lax.slice(
                x_pad,
                (0, ikh, ikw, 0),
                (n, ikh + (ho - 1) * sh + 1, ikw + (wo - 1) * sw + 1, cin),
                (1, sh, sw, 1)))          # (N, Ho, Wo, Cin)
    k_dim = kh * kw * cin
    m_dim = ho * wo
    slab = jnp.stack(taps, axis=3).reshape(n, m_dim, k_dim)
    slab = slab.astype(jnp.bfloat16)      # bf16 MXU inputs, f32 accumulation

    # OIHW -> (KH*KW*Cin, Cout), same (kh, kw, cin) order as the slab.
    w_mat = jnp.transpose(weight_oihw, (2, 3, 1, 0)).reshape(k_dim, cout)
    w_mat = w_mat.astype(jnp.bfloat16)

    # Fold inference BatchNorm into per-channel scale / bias (f32 epilogue).
    scale = (gamma.astype(jnp.float32)
             / jnp.sqrt(running_var.astype(jnp.float32) + eps)).reshape(1, cout)
    bias = (beta.astype(jnp.float32)
            - running_mean.astype(jnp.float32) * scale[0]).reshape(1, cout)

    # Row tiling of Ho*Wo (second parallel grid axis).
    tm = m_dim if m_dim <= row_tile else row_tile
    grid = (n, pl.cdiv(m_dim, tm))

    out = pl.pallas_call(
        _matmul_bn_relu_kernel,
        out_shape=jax.ShapeDtypeStruct((n, m_dim, cout), jnp.float32),
        grid_spec=pltpu.PrefetchScalarGridSpec(
            num_scalar_prefetch=0,
            grid=grid,
            in_specs=[
                pl.BlockSpec((1, tm, k_dim), lambda b, m: (b, m, 0)),
                pl.BlockSpec((k_dim, cout), lambda b, m: (0, 0)),
                pl.BlockSpec((1, cout), lambda b, m: (0, 0)),
                pl.BlockSpec((1, cout), lambda b, m: (0, 0)),
            ],
            out_specs=pl.BlockSpec((1, tm, cout), lambda b, m: (b, m, 0)),
        ),
        compiler_params=pltpu.CompilerParams(
            dimension_semantics=("parallel", "parallel"),
        ),
    )(slab, w_mat, scale, bias)

    # (N, Ho*Wo, Cout) -> NHWC -> NCHW (pure layout plumbing, outside kernel).
    return jnp.transpose(out.reshape(n, ho, wo, cout), (0, 3, 1, 2))


# ---------------------------------------------------------------------------
# Pure-JAX reference (for a correctness check).  Inputs are rounded through
# bf16 so the reference consumes exactly the values the kernel's MXU sees;
# products are then exact and only f32 summation order differs.
# ---------------------------------------------------------------------------
def _reference(x_nchw, weight_oihw, gamma, beta, running_mean, running_var,
               *, stride, eps=BATCHNORM_EPSILON):
    x = x_nchw.astype(jnp.bfloat16).astype(jnp.float32)
    w = weight_oihw.astype(jnp.bfloat16).astype(jnp.float32)
    y = jax.lax.conv_general_dilated(
        x, w,
        window_strides=(stride, stride),
        padding="SAME",
        dimension_numbers=("NCHW", "OIHW", "NCHW"),
        precision=jax.lax.Precision.HIGHEST,
    )
    scale = (gamma / jnp.sqrt(running_var + eps)).reshape(1, -1, 1, 1)
    bias = (beta - running_mean * gamma / jnp.sqrt(running_var + eps)).reshape(1, -1, 1, 1)
    return jnp.maximum(y * scale + bias, 0.0)


if __name__ == "__main__":
    # Conv(kernel=3, stride=2, input_dim=4, output_dim=8)
    kernel_size, stride, input_dim, output_dim = 3, 2, 4, 8
    batch, spatial = 2, 16

    key = jax.random.PRNGKey(0)
    k_x, k_w, k_g, k_b, k_m, k_v = jax.random.split(key, 6)

    x = jax.random.normal(k_x, (batch, input_dim, spatial, spatial), jnp.float32)

    # Conv2d weight (OIHW), kaiming-uniform-like deterministic init, bias=False
    fan_in = input_dim * kernel_size * kernel_size
    bound = 1.0 / math.sqrt(fan_in)
    weight = jax.random.uniform(
        k_w, (output_dim, input_dim, kernel_size, kernel_size),
        jnp.float32, minval=-bound, maxval=bound)

    # BatchNorm2d parameters / running stats (deterministic, non-trivial)
    gamma = 1.0 + 0.1 * jax.random.normal(k_g, (output_dim,), jnp.float32)
    beta = 0.1 * jax.random.normal(k_b, (output_dim,), jnp.float32)
    running_mean = 0.1 * jax.random.normal(k_m, (output_dim,), jnp.float32)
    running_var = jnp.abs(1.0 + 0.1 * jax.random.normal(k_v, (output_dim,), jnp.float32))

    out = conv_bn_relu(x, weight, gamma, beta, running_mean, running_var,
                       stride=stride)
    out = jax.block_until_ready(out)

    ref = _reference(x, weight, gamma, beta, running_mean, running_var,
                     stride=stride)
    np.testing.assert_allclose(np.asarray(out), np.asarray(ref),
                               rtol=1e-4, atol=1e-4)

    print("KERNEL_OK")
</pallas_src>

<mosaic_0001>
module attributes {stable_mosaic.version = 11 : i64} {
  func.func @_matmul_bn_relu_kernel(%arg0: i32, %arg1: i32, %arg2: memref<1x64x36xbf16, #tpu.memory_space<vmem>>, %arg3: memref<36x8xbf16, #tpu.memory_space<vmem>>, %arg4: memref<1x8xf32, #tpu.memory_space<vmem>>, %arg5: memref<1x8xf32, #tpu.memory_space<vmem>>, %arg6: memref<1x64x8xf32, #tpu.memory_space<vmem>>) attributes {dimension_semantics = [#tpu.dimension_semantics<parallel>, #tpu.dimension_semantics<parallel>], iteration_bounds = array<i64: 2, 1>, scalar_prefetch = 0 : i64, scratch_operands = 0 : i64, tpu.core_type = #tpu.core_type<tc>, window_params = [{transform_indices = @transform_0, window_bounds = array<i64: 1, 64, 36>}, {pipeline_mode = #tpu.pipeline_mode<synchronous>, transform_indices = @transform_1, window_bounds = array<i64: 36, 8>}, {pipeline_mode = #tpu.pipeline_mode<synchronous>, transform_indices = @transform_2, window_bounds = array<i64: 1, 8>}, {pipeline_mode = #tpu.pipeline_mode<synchronous>, transform_indices = @transform_3, window_bounds = array<i64: 1, 8>}, {transform_indices = @transform_4, window_bounds = array<i64: 1, 64, 8>}]} {
    %c0 = arith.constant 0 : index
    %c0_0 = arith.constant 0 : index
    %c0_1 = arith.constant 0 : index
    %0 = vector.load %arg2[%c0, %c0_0, %c0_1] : memref<1x64x36xbf16, #tpu.memory_space<vmem>>, vector<1x64x36xbf16>
    %1 = vector.shape_cast %0 : vector<1x64x36xbf16> to vector<64x36xbf16>
    %c0_2 = arith.constant 0 : index
    %c0_3 = arith.constant 0 : index
    %2 = vector.load %arg3[%c0_2, %c0_3] : memref<36x8xbf16, #tpu.memory_space<vmem>>, vector<36x8xbf16>
    %cst = arith.constant dense<0.000000e+00> : vector<64x8xf32>
    %3 = tpu.matmul %1, %2, %cst {dimension_numbers = #tpu.dot_dimension_numbers<[1], [0], [0], [1], [0, 0, 1, 1], [], []>} : vector<64x36xbf16>, vector<36x8xbf16>, vector<64x8xf32> -> vector<64x8xf32>
    %c0_4 = arith.constant 0 : index
    %c0_5 = arith.constant 0 : index
    %4 = vector.load %arg4[%c0_4, %c0_5] : memref<1x8xf32, #tpu.memory_space<vmem>>, vector<1x8xf32>
    %5 = vector.broadcast %4 : vector<1x8xf32> to vector<64x8xf32>
    %6 = arith.mulf %3, %5 : vector<64x8xf32>
    %c0_6 = arith.constant 0 : index
    %c0_7 = arith.constant 0 : index
    %7 = vector.load %arg5[%c0_6, %c0_7] : memref<1x8xf32, #tpu.memory_space<vmem>>, vector<1x8xf32>
    %8 = vector.broadcast %7 : vector<1x8xf32> to vector<64x8xf32>
    %9 = arith.addf %6, %8 : vector<64x8xf32>
    %cst_8 = arith.constant 0.000000e+00 : f32
    %10 = vector.broadcast %cst_8 : f32 to vector<64x8xf32>
    %11 = arith.maximumf %9, %10 : vector<64x8xf32>
    %c0_9 = arith.constant 0 : index
    %c0_10 = arith.constant 0 : index
    %c0_11 = arith.constant 0 : index
    %12 = vector.load %arg6[%c0_9, %c0_10, %c0_11] : memref<1x64x8xf32, #tpu.memory_space<vmem>>, vector<1x64x8xf32>
    %13 = vector.shape_cast %12 : vector<1x64x8xf32> to vector<64x8xf32>
    %14 = vector.shape_cast %11 : vector<64x8xf32> to vector<1x64x8xf32>
    tpu.vector_store %arg6[%c0_9, %c0_10, %c0_11], %14 {strides = array<i32>} : memref<1x64x8xf32, #tpu.memory_space<vmem>>, vector<1x64x8xf32>,
    return
  }
  func.func @transform_0(%arg0: i32, %arg1: i32) -> (i32, i32, i32) {
    %c0_i32 = arith.constant 0 : i32
    %c0_i32_0 = arith.constant 0 : i32
    return %arg0, %arg1, %c0_i32 : i32, i32, i32
  }
  func.func @transform_1(%arg0: i32, %arg1: i32) -> (i32, i32) {
    %c0_i32 = arith.constant 0 : i32
    %c0_i32_0 = arith.constant 0 : i32
    %c0_i32_1 = arith.constant 0 : i32
    return %c0_i32, %c0_i32_0 : i32, i32
  }
  func.func @transform_2(%arg0: i32, %arg1: i32) -> (i32, i32) {
    %c0_i32 = arith.constant 0 : i32
    %c0_i32_0 = arith.constant 0 : i32
    %c0_i32_1 = arith.constant 0 : i32
    return %c0_i32, %c0_i32_0 : i32, i32
  }
  func.func @transform_3(%arg0: i32, %arg1: i32) -> (i32, i32) {
    %c0_i32 = arith.constant 0 : i32
    %c0_i32_0 = arith.constant 0 : i32
    %c0_i32_1 = arith.constant 0 : i32
    return %c0_i32, %c0_i32_0 : i32, i32
  }
  func.func @transform_4(%arg0: i32, %arg1: i32) -> (i32, i32, i32) {
    %c0_i32 = arith.constant 0 : i32
    %c0_i32_0 = arith.constant 0 : i32
    return %arg0, %arg1, %c0_i32 : i32, i32, i32
  }
}

</mosaic_0001>

<llo_original>
// kernel: tpu_custom_call.1
$region0: #{tpu_custom_call.1}
  #allocation0 [shape = 'u32[]', space=smem, size = 0x4, offset = 0x4, fixed_abs, tag = 'smem constant byte address 0x4 - core index']
  #allocation1 [shape = 'u32[144,128]{1,0:T(1,128)}', space=vmem, size = 0x12000, scoped, tag = 'internal scratch']
  %s0 = inlined_call_operand.vmem [shape: bf16[2,64,36], index: 0, kind: input, shape index: {}]
  %s1 = inlined_call_operand.vmem [shape: bf16[36,8], index: 1, kind: input, shape index: {}]
  %s2 = inlined_call_operand.vmem [shape: f32[1,8], index: 2, kind: input, shape index: {}]
  %s3 = inlined_call_operand.vmem [shape: f32[1,8], index: 3, kind: input, shape index: {}]
  %s4 = inlined_call_operand.vmem [shape: f32[2,64,8], index: 4, kind: output, shape index: {}]
  %s5 = sld [smem:[#allocation0]]
  $region49: #{tpu_custom_call.1} parent=0
    _
  %s7 = ssub.s32 1, %s5
  %s8 = scalar_select 0, %s7, %s5
  loop: start=0, step=1, limit=4
  $region2: #{tpu_custom_call.1} parent=0 // loop_pre_header
    _
  $region3: #{tpu_custom_call.1} parent=0 // loop_header
    %s10 = sphi 0, %s14
    %p11 = scmp.ge.s32.totalorder %s10, 4
    %s17 = sphi 0, %s29
    %s18 = sphi 0, %s25
    %s19 = sphi 0, %s17
    %s20 = sphi 0, %s18
    %s21 = sphi 0, %s19
    %s22 = sphi 0, %s20
    %s34 = sphi 0, %s36
    %s37 = sphi 0, %s34
    %s38 = sphi 0, %s37
    %s54 = sphi 0, %s38
    %s58 = sphi 0, %s58
    %s60 = sphi 0, %s58
    %s61 = sphi 0, %s60
    %s75 = sphi 0, %s61
    %s79 = sphi 0, %s79
    %s81 = sphi 0, %s79
    %s82 = sphi 0, %s81
    %s96 = sphi 0, %s82
    %s100 = sphi 0, %s100
    %s102 = sphi 0, %s100
    %s103 = sphi 0, %s102
    %s117 = sphi 0, %s103
    %s125 = sphi 0, %s127
    %s128 = sphi 0, %s125
    %s129 = sphi 0, %s128
    %s145 = sphi 0, %s129
  $region4: #{tpu_custom_call.1} parent=0 // loop_header_branch
    %13 = sbr.rel (%p11) target = $region8
  $region5: #{tpu_custom_call.1} parent=0 // loop_body
    %s15 = ssub.s32 %s10, 1
    %s16 = ssub.s32 %s10, 2
    %s23 = sadd.s32 1, %s18
    %p24 = scmp.ge.s32.totalorder %s23, 1
    %s25 = scalar_select %p24, 0, %s23
    %s26 = sadd.s32 1, %s17
    %s27 = scalar_select %p24, %s26, %s17
    %p28 = scmp.ge.s32.totalorder %s27, 2
    %s29 = scalar_select %p28, 0, %s27
    %s30 = ssub.s32 %s17, %s29
    %s31 = ssub.s32 %s18, %s25
    %s32 = sor.u32 %s30, %s31
    %p33 = scmp.eq.s32.totalorder %s32, 0
    %s35 = sadd.s32 %s34, 1
    %s36 = scalar_select %p33, %s34, %s35
    %p39 = pneg %p33
    %p40 = scmp.eq.s32.totalorder %s10, 1
    %p41 = por %p39, %p40
    %p42 = scmp.ne.s32.totalorder %s34, %s37
    %p43 = scmp.eq.s32.totalorder %s10, 0
    %p44 = por %p42, %p43
    %p45 = scmp.ne.s32.totalorder %s34, %s37
    %p46 = scmp.eq.s32.totalorder %s15, 1
    %p47 = por %p45, %p46
    %p48 = scmp.ne.s32.totalorder %s37, %s38
    %p49 = scmp.eq.s32.totalorder %s15, 0
    %p50 = por %p48, %p49
    %p51 = scmp.ne.s32.totalorder %s37, %s38
    %p52 = scmp.eq.s32.totalorder %s16, 1
    %p53 = por %p51, %p52
    %p55 = scmp.ne.s32.totalorder %s38, %s54
    %p56 = scmp.eq.s32.totalorder %s16, 0
    %p57 = por %p55, %p56
    %s59 = sadd.s32 %s58, 1
    %p62 = scmp.eq.s32.totalorder %s10, 1
    %p63 = scmp.ne.s32.totalorder %s58, %s60
    %p64 = scmp.eq.s32.totalorder %s10, 0
    %p65 = por %p63, %p64
    %p66 = scmp.ne.s32.totalorder %s58, %s60
    %p67 = scmp.eq.s32.totalorder %s15, 1
    %p68 = por %p66, %p67
    %p69 = scmp.ne.s32.totalorder %s60, %s61
    %p70 = scmp.eq.s32.totalorder %s15, 0
    %p71 = por %p69, %p70
    %p72 = scmp.ne.s32.totalorder %s60, %s61
    %p73 = scmp.eq.s32.totalorder %s16, 1
    %p74 = por %p72, %p73
    %p76 = scmp.ne.s32.totalorder %s61, %s75
    %p77 = scmp.eq.s32.totalorder %s16, 0
    %p78 = por %p76, %p77
    %s80 = sadd.s32 %s79, 1
    %p83 = scmp.eq.s32.totalorder %s10, 1
    %p84 = scmp.ne.s32.totalorder %s79, %s81
    %p85 = scmp.eq.s32.totalorder %s10, 0
    %p86 = por %p84, %p85
    %p87 = scmp.ne.s32.totalorder %s79, %s81
    %p88 = scmp.eq.s32.totalorder %s15, 1
    %p89 = por %p87, %p88
    %p90 = scmp.ne.s32.totalorder %s81, %s82
    %p91 = scmp.eq.s32.totalorder %s15, 0
    %p92 = por %p90, %p91
    %p93 = scmp.ne.s32.totalorder %s81, %s82
    %p94 = scmp.eq.s32.totalorder %s16, 1
    %p95 = por %p93, %p94
    %p97 = scmp.ne.s32.totalorder %s82, %s96
    %p98 = scmp.eq.s32.totalorder %s16, 0
    %p99 = por %p97, %p98
    %s101 = sadd.s32 %s100, 1
    %p104 = scmp.eq.s32.totalorder %s10, 1
    %p105 = scmp.ne.s32.totalorder %s100, %s102
    %p106 = scmp.eq.s32.totalorder %s10, 0
    %p107 = por %p105, %p106
    %p108 = scmp.ne.s32.totalorder %s100, %s102
    %p109 = scmp.eq.s32.totalorder %s15, 1
    %p110 = por %p108, %p109
    %p111 = scmp.ne.s32.totalorder %s102, %s103
    %p112 = scmp.eq.s32.totalorder %s15, 0
    %p113 = por %p111, %p112
    %p114 = scmp.ne.s32.totalorder %s102, %s103
    %p115 = scmp.eq.s32.totalorder %s16, 1
    %p116 = por %p114, %p115
    %p118 = scmp.ne.s32.totalorder %s103, %s117
    %p119 = scmp.eq.s32.totalorder %s16, 0
    %p120 = por %p118, %p119
    %s121 = ssub.s32 %s17, %s29
    %s122 = ssub.s32 %s18, %s25
    %s123 = sor.u32 %s121, %s122
    %p124 = scmp.eq.s32.totalorder %s123, 0
    %s126 = sadd.s32 %s125, 1
    %s127 = scalar_select %p124, %s125, %s126
    %p130 = pneg %p124
    %p131 = scmp.eq.s32.totalorder %s10, 1
    %p132 = por %p130, %p131
    %p133 = scmp.ne.s32.totalorder %s125, %s128
    %p134 = scmp.eq.s32.totalorder %s10, 0
    %p135 = por %p133, %p134
    %p136 = scmp.ne.s32.totalorder %s125, %s128
    %p137 = scmp.eq.s32.totalorder %s15, 1
    %p138 = por %p136, %p137
    %p139 = scmp.ne.s32.totalorder %s128, %s129
    %p140 = scmp.eq.s32.totalorder %s15, 0
    %p141 = por %p139, %p140
    %p142 = scmp.ne.s32.totalorder %s128, %s129
    %p143 = scmp.eq.s32.totalorder %s16, 1
    %p144 = por %p142, %p143
    %p146 = scmp.ne.s32.totalorder %s129, %s145
    %p147 = scmp.eq.s32.totalorder %s16, 0
    %p148 = por %p146, %p147
    %p149 = scmp.le.s32.totalorder 1, %s10
    %p150 = scmp.lt.s32.totalorder %s10, 3
    %p151 = pnand %p149, %p150
    %p152 = pneg %p151
    // Predicated region
    $region9: #{tpu_custom_call.1} parent=5 // pred_check
      _
    $region10: #{tpu_custom_call.1} parent=5 // pred_check_branch
      %154 = sbr.rel (%p151) target = $region12
    $region11: #{tpu_custom_call.1} parent=5 // pred_region
      %s155 = ssub.s32 %s10, 1
      // Predicated region
      $region13: #{tpu_custom_call.1} parent=11 // pred_check
        %p156 = pneg %p71
      $region14: #{tpu_custom_call.1} parent=11 // pred_check_branch
        %158 = sbr.rel (%p156) target = $region16
      $region15: #{tpu_custom_call.1} parent=11 // pred_region
        _
      $region16: #{tpu_custom_call.1} parent=11 // pred_fallthru
        _
      // Predicated region
      $region17: #{tpu_custom_call.1} parent=11 // pred_check
        %p159 = pneg %p92
      $region18: #{tpu_custom_call.1} parent=11 // pred_check_branch
        %161 = sbr.rel (%p159) target = $region20
      $region19: #{tpu_custom_call.1} parent=11 // pred_region
        _
      $region20: #{tpu_custom_call.1} parent=11 // pred_fallthru
        _
      // Predicated region
      $region21: #{tpu_custom_call.1} parent=11 // pred_check
        %p162 = pneg %p113
      $region22: #{tpu_custom_call.1} parent=11 // pred_check_branch
        %164 = sbr.rel (%p162) target = $region24
      $region23: #{tpu_custom_call.1} parent=11 // pred_region
        _
      $region24: #{tpu_custom_call.1} parent=11 // pred_fallthru
        _
    $region12: #{tpu_custom_call.1} parent=5 // pred_fallthru
      _
    %p165 = scmp.lt.s32.totalorder %s10, 2
    // Predicated region
    $region25: #{tpu_custom_call.1} parent=5 // pred_check
      %p166 = pneg %p165
    $region26: #{tpu_custom_call.1} parent=5 // pred_check_branch
      %168 = sbr.rel (%p166) target = $region28
    $region27: #{tpu_custom_call.1} parent=5 // pred_region
      // Predicated region
      $region29: #{tpu_custom_call.1} parent=27 // pred_check
        %p169 = pneg %p44
      $region30: #{tpu_custom_call.1} parent=27 // pred_check_branch
        %171 = sbr.rel (%p169) target = $region32
      $region31: #{tpu_custom_call.1} parent=27 // pred_region
        %s172 = smul.u32 8, %s18
        %p173 = scmp.lt.s32.totalorder %s17, 1
        %s174 = scalar_select %p173, %s17, 1
        %p175 = scmp.lt.s32.totalorder %s172, 7
        %s176 = scalar_select %p175, %s172, 7
        %s177 = smul.addr %s174, 8
        %s178 = sadd.s32 %s176, %s177
        %s179 = smul.addr %s178, 4
        %s180 = scalar_lea.vmem %s0, %s179
        %s181 = smul.u32 8, %s18
      $region32: #{tpu_custom_call.1} parent=27 // pred_fallthru
        _
    $region28: #{tpu_custom_call.1} parent=5 // pred_fallthru
      _
    %p182 = scmp.le.s32.totalorder 1, %s10
    %p183 = scmp.lt.s32.totalorder %s10, 3
    %p184 = pnand %p182, %p183
    %p185 = pneg %p184
    // Predicated region
    $region33: #{tpu_custom_call.1} parent=5 // pred_check
      _
    $region34: #{tpu_custom_call.1} parent=5 // pred_check_branch
      %187 = sbr.rel (%p184) target = $region36
    $region35: #{tpu_custom_call.1} parent=5 // pred_region
      %s188 = ssub.s32 %s10, 1
      %s189 = smul.u32 8, %s20
      %p190 = scmp.lt.s32.totalorder %s19, 1
      %s191 = scalar_select %p190, %s19, 1
      %p192 = scmp.lt.s32.totalorder %s189, 7
      %s193 = scalar_select %p192, %s189, 7
      %s194 = smul.addr %s191, 8
      %s195 = sadd.s32 %s193, %s194
      %s196 = smul.addr %s195, 4
      %s197 = scalar_lea.vmem %s0, %s196
      %p198 = pneg %p50
      %p199 = pneg %p47
      %p200 = pneg %p71
      %p201 = pneg %p68
      %p202 = pneg %p92
      %p203 = pneg %p89
      %p204 = pneg %p113
      %p205 = pneg %p110
      %p206 = pneg %p141
      %p207 = pneg %p138
      %s208 = smul.u32 8, %s20
      %p209 = scmp.lt.s32.totalorder %s19, 1
      %s210 = scalar_select %p209, %s19, 1
      %p211 = scmp.lt.s32.totalorder %s208, 7
      %s212 = scalar_select %p211, %s208, 7
      %s213 = smul.addr %s210, 8
      %s214 = sadd.s32 %s212, %s213
      %s215 = smul.addr %s214, 8
      %s216 = scalar_lea.vmem %s4, %s215
      %s217 = smul.u32 8, %s20
      %p218 = scmp.lt.s32.totalorder %s19, 1
      %s219 = scalar_select %p218, %s19, 1
      %p220 = scmp.lt.s32.totalorder %s217, 7
      %s221 = scalar_select %p220, %s217, 7
      %s222 = smul.addr %s219, 8
      %s223 = sadd.s32 %s221, %s222
      %s224 = smul.addr %s223, 4
      %s225 = scalar_lea.vmem %s0, %s224
      %s226 = smul.u32 8, %s20
      %s227 = smul.u32 8, %s20
      %p228 = scmp.lt.s32.totalorder %s19, 1
      %s229 = scalar_select %p228, %s19, 1
      %p230 = scmp.lt.s32.totalorder %s227, 7
      %s231 = scalar_select %p230, %s227, 7
      %s232 = smul.addr %s229, 8
      %s233 = sadd.s32 %s231, %s232
      %s234 = smul.addr %s233, 8
      %s235 = scalar_lea.vmem %s4, %s234
      %s236 = smul.u32 8, %s20
      %v238 = vld [vmem:[%s225] sm:$0xf]
      %v239 = vld [vmem:[%s225 + $0x4] sm:$0xf]
      %v240 = vld [vmem:[%s225 + $0x8] sm:$0xf]
      %v241 = vld [vmem:[%s225 + $0xc] sm:$0xf]
      %v242 = vld [vmem:[%s225 + $0x10] sm:$0xf]
      %v243 = vld [vmem:[%s225 + $0x14] sm:$0xf]
      %v244 = vld [vmem:[%s225 + $0x18] sm:$0xf]
      %v245 = vld [vmem:[%s225 + $0x1c] sm:$0xf]
      %v246 = vld [vmem:[%s1] sm:$0xf]
      %v247 = vld [vmem:[%s1 + $0x4] sm:$0xf]
      %v248 = vld [vmem:[%s1 + $0x8] sm:$0xf]
      %v249 = vld [vmem:[%s1 + $0xc] sm:$0xf]
      %v250 = vld [vmem:[%s1 + $0x10] sm:$0x3]
      %v259 = vunpack.c.l.b16 %v238
      %v260 = vunpack.c.l.b16 %v239
      %v261 = vunpack.c.l.b16 %v240
      %v262 = vunpack.c.l.b16 %v241
      %v263 = vunpack.c.l.b16 %v242
      %v264 = vunpack.c.l.b16 %v243
      %v265 = vunpack.c.l.b16 %v244
      %v266 = vunpack.c.l.b16 %v245
      %v267 = vpack.c.b16 %v260, %v259
      %v268 = vpack.c.b16 %v262, %v261
      %v269 = vpack.c.b16 %v264, %v263
      %v270 = vpack.c.b16 %v266, %v265
      %v276 = vunpack.c.l.b16 %v246
      %v277 = vunpack.c.l.b16 %v247
      %v278 = vunpack.c.l.b16 %v248
      %v279 = vunpack.c.l.b16 %v249
      %v280 = vunpack.c.l.b16 %v250
      %v281 = vpack.c.b16 %v277, %v276
      %v282 = vpack.c.b16 %v279, %v278
      %v283 = vpack.c.b16 %v280, %v280
      %vm286 = vcmask 293888
      %v288 = vsel %vm286, %v267, 0
      %v291 = vsel %vm286, %v268, 0
      %v294 = vsel %vm286, %v269, 0
      %v297 = vsel %vm286, %v270, 0
      %vm299 = vcmask 1041408
      %v301 = vsel %vm299, %v283, 0
      %303 = vmatprep.subr.bf16.mxu0 0
      %304 = vmatpush1.bf16.msra.mxu0 %v281
      %305 = vmatprep.subr.bf16.mxu0 0
      %306 = vmatpush1.bf16.msra.mxu0 %v282
      %307 = vmatprep.subr.bf16.mxu0 0
      %308 = vmatpush1.bf16.msra.mxu0 %v301
      %309 = vmatprep.subr.bf16.mxu0 0
      %310 = vmatpush1.bf16.msra.mxu0 0
      %311 = vmatprep.subr.bf16.mxu0 0
      %312 = vmatpush1.bf16.msra.mxu0 0
      %313 = vmatprep.subr.bf16.mxu0 0
      %314 = vmatpush1.bf16.msra.mxu0 0
      %315 = vmatprep.subr.bf16.mxu0 0
      %316 = vmatpush1.bf16.msra.mxu0 0
      %317 = vmatprep.subr.bf16.mxu0 0
      %318 = vmatpush1.bf16.msra.mxu0 0
      %319 = vmatprep.subr.bf16.mxu0 0
      %320 = vmatpush1.bf16.msra.mxu0 0
      %321 = vmatprep.subr.bf16.mxu0 0
      %322 = vmatpush1.bf16.msra.mxu0 0
      %323 = vmatprep.subr.bf16.mxu0 0
      %324 = vmatpush1.bf16.msra.mxu0 0
      %325 = vmatprep.subr.bf16.mxu0 0
      %326 = vmatpush1.bf16.msra.mxu0 0
      %327 = vmatprep.subr.bf16.mxu0 0
      %328 = vmatpush1.bf16.msra.mxu0 0
      %329 = vmatprep.subr.bf16.mxu0 0
      %330 = vmatpush1.bf16.msra.mxu0 0
      %331 = vmatprep.subr.bf16.mxu0 0
      %332 = vmatpush1.bf16.msra.mxu0 0
      %333 = vmatprep.subr.bf16.mxu0 0
      %334 = vmatpush1.bf16.msra.mxu0 0
      %335 = vmatprep.mubr.bf16.mxu0 0
      %336 = vmatmul.mubr.bf16.gmra.mrb[0].mxu0 %v288
      %v337 = vpop.f32.mrb[0].mxu0
      %v338 = vadd.f32 0.0, %v337
      %v339 = vpop.f32.mrb[0].mxu0
      %v340 = vpop.f32.mrb[0].mxu0
      %v341 = vadd.f32 0.0, %v340
      %v342 = vpop.f32.mrb[0].mxu0
      %343 = vmatprep.mubr.bf16.mxu0 0
      %344 = vmatmul.mubr.bf16.gmra.mrb[0].mxu0 %v291
      %v345 = vpop.f32.mrb[0].mxu0
      %v346 = vadd.f32 0.0, %v345
      %v347 = vpop.f32.mrb[0].mxu0
      %v348 = vpop.f32.mrb[0].mxu0
      %v349 = vadd.f32 0.0, %v348
      %v350 = vpop.f32.mrb[0].mxu0
      %351 = vmatprep.mubr.bf16.mxu0 0
      %352 = vmatmul.mubr.bf16.gmra.mrb[0].mxu0 %v294
      %v353 = vpop.f32.mrb[0].mxu0
      %v354 = vadd.f32 0.0, %v353
      %v355 = vpop.f32.mrb[0].mxu0
      %v356 = vpop.f32.mrb[0].mxu0
      %v357 = vadd.f32 0.0, %v356
      %v358 = vpop.f32.mrb[0].mxu0
      %359 = vmatprep.mubr.bf16.mxu0 0
      %360 = vmatmul.mubr.bf16.gmra.mrb[0].mxu0 %v297
      %v361 = vpop.f32.mrb[0].mxu0
      %v362 = vadd.f32 0.0, %v361
      %v363 = vpop.f32.mrb[0].mxu0
      %v364 = vpop.f32.mrb[0].mxu0
      %v365 = vadd.f32 0.0, %v364
      %v366 = vpop.f32.mrb[0].mxu0
      %367 = vdwg.mxu0
      %v368 = vld [vmem:[%s2] sm:$0x1]
      %v370 = vlaneseq
      %v371 = vshrl.u32 %v370, 7
      %v372 = vsub.s32 0, %v371
      %v373 = vrot.slane %v368, %v372
      %v375 = vmul.f32 %v338, %v373
      %v376 = vmul.f32 %v341, %v373
      %v377 = vmul.f32 %v346, %v373
      %v378 = vmul.f32 %v349, %v373
      %v379 = vmul.f32 %v354, %v373
      %v380 = vmul.f32 %v357, %v373
      %v381 = vmul.f32 %v362, %v373
      %v382 = vmul.f32 %v365, %v373
      %v383 = vld [vmem:[%s3] sm:$0x1]
      %v385 = vlaneseq
      %v386 = vshrl.u32 %v385, 7
      %v387 = vsub.s32 0, %v386
      %v388 = vrot.slane %v383, %v387
      %v390 = vadd.f32 %v375, %v388
      %v391 = vadd.f32 %v376, %v388
      %v392 = vadd.f32 %v377, %v388
      %v393 = vadd.f32 %v378, %v388
      %v394 = vadd.f32 %v379, %v388
      %v395 = vadd.f32 %v380, %v388
      %v396 = vadd.f32 %v381, %v388
      %v397 = vadd.f32 %v382, %v388
      %v398 = vmax.f32 %v390, 0.0
      %v399 = vmax.f32 %v391, 0.0
      %v400 = vmax.f32 %v392, 0.0
      %v401 = vmax.f32 %v393, 0.0
      %v402 = vmax.f32 %v394, 0.0
      %v403 = vmax.f32 %v395, 0.0
      %v404 = vmax.f32 %v396, 0.0
      %v405 = vmax.f32 %v397, 0.0
      %vm406 = vcmask 64512
      %407 = vst.msk [vmem:[%s235] sm:$0xff] %vm406, %v398
      %408 = vst.msk [vmem:[%s235 + $0x8] sm:$0xff] %vm406, %v399
      %409 = vst.msk [vmem:[%s235 + $0x10] sm:$0xff] %vm406, %v400
      %410 = vst.msk [vmem:[%s235 + $0x18] sm:$0xff] %vm406, %v401
      %411 = vst.msk [vmem:[%s235 + $0x20] sm:$0xff] %vm406, %v402
      %412 = vst.msk [vmem:[%s235 + $0x28] sm:$0xff] %vm406, %v403
      %413 = vst.msk [vmem:[%s235 + $0x30] sm:$0xff] %vm406, %v404
      %414 = vst.msk [vmem:[%s235 + $0x38] sm:$0xff] %vm406, %v405
      %s415 = smul.u32 8, %s20
      %p416 = scmp.lt.s32.totalorder %s19, 1
      %s417 = scalar_select %p416, %s19, 1
      %p418 = scmp.lt.s32.totalorder %s415, 7
      %s419 = scalar_select %p418, %s415, 7
      %s420 = smul.addr %s417, 8
      %s421 = sadd.s32 %s419, %s420
      %s422 = smul.addr %s421, 8
      %s423 = scalar_lea.vmem %s4, %s422
      // Predicated region
      $region37: #{tpu_custom_call.1} parent=35 // pred_check
        %p424 = pneg %p138
      $region38: #{tpu_custom_call.1} parent=35 // pred_check_branch
        %426 = sbr.rel (%p424) target = $region40
      $region39: #{tpu_custom_call.1} parent=35 // pred_region
        %s427 = smul.u32 8, %s20
      $region40: #{tpu_custom_call.1} parent=35 // pred_fallthru
        _
    $region36: #{tpu_custom_call.1} parent=5 // pred_fallthru
      _
    %p428 = scmp.le.s32.totalorder 2, %s10
    // Predicated region
    $region41: #{tpu_custom_call.1} parent=5 // pred_check
      %p429 = pneg %p428
    $region42: #{tpu_custom_call.1} parent=5 // pred_check_branch
      %431 = sbr.rel (%p429) target = $region44
    $region43: #{tpu_custom_call.1} parent=5 // pred_region
      %s432 = ssub.s32 %s10, 2
      // Predicated region
      $region45: #{tpu_custom_call.1} parent=43 // pred_check
        %p433 = pneg %p144
      $region46: #{tpu_custom_call.1} parent=43 // pred_check_branch
        %435 = sbr.rel (%p433) target = $region48
      $region47: #{tpu_custom_call.1} parent=43 // pred_region
        %s436 = smul.u32 8, %s22
        %p437 = scmp.lt.s32.totalorder %s21, 1
        %s438 = scalar_select %p437, %s21, 1
        %p439 = scmp.lt.s32.totalorder %s436, 7
        %s440 = scalar_select %p439, %s436, 7
        %s441 = smul.addr %s438, 8
        %s442 = sadd.s32 %s440, %s441
        %s443 = smul.addr %s442, 8
        %s444 = scalar_lea.vmem %s4, %s443
      $region48: #{tpu_custom_call.1} parent=43 // pred_fallthru
        _
    $region44: #{tpu_custom_call.1} parent=5 // pred_fallthru
      _
  $region6: #{tpu_custom_call.1} parent=0 // loop_footer
    %s14 = sadd.s32 1, %s10
  $region7: #{tpu_custom_call.1} parent=0 // loop_footer_branch
    %9 = sbr.rel target = $region3
  $region8: #{tpu_custom_call.1} parent=0 // loop_exit
    _

</llo_original>
